<compile_context>
chip_gen: v7x
topology: tpu7x:2x2x1
jax: 0.10.0
libtpu: 0.0.40
codegen_flags: <defaults>
</compile_context>

<pallas_src>
import math

import jax
import jax.numpy as jnp
from jax.experimental import pallas as pl
from jax.experimental.pallas import tpu as pltpu

_MiB = 1024 * 1024


def _round_up(x, m):
    return (x + m - 1) // m * m


def _vmem_capacity_bytes():
    try:
        info = pltpu.get_tpu_info()
        cap = getattr(info, "vmem_capacity_bytes", None)
        if cap:
            return int(cap)
    except Exception:
        pass
    return 64 * _MiB  # conservative default (v7x per-TC VMEM)


def _largest_tile(total, upper):
    """Largest multiple of 128 that divides `total` (a 128-multiple), <= upper."""
    t = min(upper, total)
    t -= t % 128
    t = max(t, 128)
    while total % t:
        t -= 128
    return t


def _make_plan(in_features, out_features, out_itemsize):
    """Chip-aware tiling plan; depends only on (K, N, chip), computed once."""
    cap = _vmem_capacity_bytes()
    if cap >= 100 * _MiB:              # v5e / v6e: 128 MiB physical VMEM
        rb_max, cb_max, tk_max = 512, 2048, 2048
    else:                              # v7x: 64 MiB per TensorCore
        rb_max, cb_max, tk_max = 256, 1024, 2048
    vmem_limit = int(cap * 0.8)        # leave headroom for Mosaic internals

    K, N = in_features, out_features
    N_p = _round_up(N, 128)
    cb = _largest_tile(N_p, cb_max)

    if K <= tk_max:
        tk, K_p = K, K                 # one-shot contraction, no K padding
    else:
        tk = 0
        for cand in (2048, 1536, 1024, 768, 512):
            if cand <= tk_max and K % cand == 0:
                tk = cand
                break
        if tk == 0:
            tk = min(512, tk_max)      # pad K up to a multiple of tk
        K_p = _round_up(K, tk)
    k_tiled = (K_p // tk) > 1

    def est(rb, cb_):
        x_t = rb * tk * 4                       # x tile stays f32 (cast on VPU)
        w_t = tk * cb_ * 2                      # bf16 weight tile
        b_t = cb_ * 4
        o_t = rb * cb_ * out_itemsize
        acc = rb * cb_ * 4 if k_tiled else 0
        return 2 * (x_t + w_t + b_t + o_t) + acc   # double-buffered + scratch

    # Defaults fit comfortably; shrink defensively if a custom config doesn't.
    while est(rb_max, cb) > vmem_limit:
        if cb > 128:
            cb = _largest_tile(N_p, cb - 128)
        elif rb_max > 8:
            rb_max = max(8, rb_max // 2)
        else:
            break

    return dict(K=K, K_p=K_p, N=N, N_p=N_p, tk=tk, cb=cb, rb_max=rb_max,
                vmem_limit=vmem_limit)


def _prepare_params(weight, bias, plan, mxu_dtype=jnp.bfloat16):
    """Done ONCE per weight: pad, transpose to (K_p, N_p), cast to bf16."""
    N, K = weight.shape
    K_p, N_p = plan["K_p"], plan["N_p"]
    w = weight
    if (N_p, K_p) != (N, K):
        w = jnp.pad(w, ((0, N_p - N), (0, K_p - K)))
    w_t = w.T.astype(mxu_dtype)                    # (K_p, N_p): lane-dense out
    b = bias
    if N_p != N:
        b = jnp.pad(b, (0, N_p - N))
    b2 = b.reshape(1, N_p).astype(jnp.float32)
    return w_t, b2


def _linear_kernel_oneshot(x_ref, w_ref, b_ref, o_ref):
    # x: (rb, K) f32 -> bf16 on the VPU; w: (K, cb) bf16; b: (1, cb) f32.
    w = w_ref[...]
    acc = jnp.dot(x_ref[...].astype(w.dtype), w,
                  preferred_element_type=jnp.float32)
    o_ref[...] = (acc + b_ref[...]).astype(o_ref.dtype)


def _linear_kernel_acc(x_ref, w_ref, b_ref, o_ref, acc_ref):
    k = pl.program_id(2)

    @pl.when(k == 0)
    def _():
        acc_ref[...] = jnp.zeros_like(acc_ref)

    w = w_ref[...]
    acc_ref[...] += jnp.dot(x_ref[...].astype(w.dtype), w,
                            preferred_element_type=jnp.float32)

    @pl.when(k == pl.num_programs(2) - 1)
    def _():
        o_ref[...] = (acc_ref[...] + b_ref[...]).astype(o_ref.dtype)


def _pick_rb(rows, rb_max):
    rows_al = _round_up(rows, 8)
    if rows_al <= rb_max:
        return rows_al
    rb = rb_max
    # Shrink for ragged row counts so padding waste stays <= ~12.5%.
    while rb > 64 and (_round_up(rows, rb) - rows) * 8 > rows:
        rb //= 2
    return rb


def _linear_forward_prepared(x, w_t, b2, plan, out_features, out_dtype):
    *lead, K = x.shape
    assert K == plan["K"], (K, plan["K"])
    K_p, N_p, tk, cb = plan["K_p"], plan["N_p"], plan["tk"], plan["cb"]

    rows = math.prod(lead) if lead else 1
    x2 = x.reshape(rows, K)

    rb = _pick_rb(rows, plan["rb_max"])
    rows_p = _round_up(rows, rb)
    # v7x has 2 TensorCores sharing the "parallel" grid axes: make sure a tiny
    # problem still produces >= 2 parallel steps.
    if (N_p // cb) * (rows_p // rb) == 1 and rb % 16 == 0:
        rb //= 2

    pad_r, pad_k = rows_p - rows, K_p - K
    if pad_r or pad_k:
        x2 = jnp.pad(x2, ((0, pad_r), (0, pad_k)))

    n_k = K_p // tk
    grid = (N_p // cb, rows_p // rb, n_k)

    kernel = _linear_kernel_acc if n_k > 1 else _linear_kernel_oneshot
    scratch = [pltpu.VMEM((rb, cb), jnp.float32)] if n_k > 1 else []

    out = pl.pallas_call(
        kernel,
        out_shape=jax.ShapeDtypeStruct((rows_p, N_p), out_dtype),
        grid_spec=pltpu.PrefetchScalarGridSpec(
            num_scalar_prefetch=0,
            grid=grid,
            in_specs=[
                pl.BlockSpec((rb, tk), lambda j, i, k: (i, k)),   # x (f32)
                pl.BlockSpec((tk, cb), lambda j, i, k: (k, j)),   # W.T (bf16)
                pl.BlockSpec((1, cb), lambda j, i, k: (0, j)),    # bias (f32)
            ],
            out_specs=pl.BlockSpec((rb, cb), lambda j, i, k: (i, j)),
            scratch_shapes=scratch,
        ),
        compiler_params=pltpu.CompilerParams(
            dimension_semantics=("parallel", "parallel", "arbitrary"),
            vmem_limit_bytes=plan["vmem_limit"],
        ),
    )(x2, w_t, b2)

    out = out[:rows, :out_features]
    return out.reshape(*lead, out_features)


class PallasLinear:
    """Pallas TPU equivalent of the reference module: nn.Linear with
    kaiming_normal_ weight (fan_in mode, gain sqrt(2)) and zero bias."""

    def __init__(self, in_features, out_features, *, key,
                 out_dtype=jnp.float32):
        self.in_features = in_features
        self.out_features = out_features
        w = jax.random.normal(key, (out_features, in_features), jnp.float32)
        self.weight = w * jnp.sqrt(2.0 / in_features)   # kaiming_normal_
        self.bias = jnp.zeros((out_features,), jnp.float32)
        self._out_dtype = out_dtype
        self._plan = _make_plan(in_features, out_features,
                                jnp.dtype(out_dtype).itemsize)
        # Hoisted once: padded + transposed + bf16-cast weight, f32 bias row.
        self._w_t, self._b2 = _prepare_params(self.weight, self.bias,
                                              self._plan)

    def __call__(self, x):
        return _linear_forward_prepared(x, self._w_t, self._b2, self._plan,
                                        self.out_features, self._out_dtype)


def linear_forward(x, weight, bias, *, out_dtype=None):
    """One-off functional form. Re-preps the weight on every call; prefer
    PallasLinear for repeated calls so the transpose/cast is cached."""
    out_dtype = out_dtype if out_dtype is not None else x.dtype
    N, K = weight.shape
    plan = _make_plan(K, N, jnp.dtype(out_dtype).itemsize)
    w_t, b2 = _prepare_params(weight, bias, plan)
    return _linear_forward_prepared(x, w_t, b2, plan, N, out_dtype)


if __name__ == "__main__":
    key = jax.random.PRNGKey(0)
    k_mod, kx1, kx2, kw2, kx3, kw3 = jax.random.split(key, 6)

    # Shapes implied by the module: (batch, seq, in_features) -> out_features.
    B, S, IN, OUT = 2, 8, 32, 32
    mod = PallasLinear(IN, OUT, key=k_mod)
    x = jax.random.normal(kx1, (B, S, IN), dtype=jnp.float32)
    y = jax.block_until_ready(mod(x))
    ref = x @ mod.weight.T + mod.bias
    assert y.shape == (B, S, OUT)
    assert jnp.allclose(y, ref, atol=5e-2, rtol=5e-2), float(
        jnp.max(jnp.abs(y - ref)))

    # Ragged / non-128 shapes (exercises N-padding + row padding paths).
    x2 = jax.random.normal(kx2, (10, 48), dtype=jnp.float32)
    w2 = jax.random.normal(kw2, (100, 48), dtype=jnp.float32) * jnp.sqrt(2.0 / 48)
    b2 = jnp.zeros((100,), dtype=jnp.float32)
    y2 = jax.block_until_ready(linear_forward(x2, w2, b2))
    ref2 = x2 @ w2.T + b2
    assert y2.shape == (10, 100)
    assert jnp.allclose(y2, ref2, atol=5e-2, rtol=5e-2), float(
        jnp.max(jnp.abs(y2 - ref2)))

    # K large enough to take the K-tiled accumulator path (K > 2048).
    Kbig = 2304
    x3 = jax.random.normal(kx3, (24, Kbig), dtype=jnp.float32)
    w3 = jax.random.normal(kw3, (256, Kbig), dtype=jnp.float32) * jnp.sqrt(
        2.0 / Kbig)
    b3 = jnp.zeros((256,), dtype=jnp.float32)
    y3 = jax.block_until_ready(linear_forward(x3, w3, b3))
    ref3 = x3 @ w3.T + b3
    assert jnp.allclose(y3, ref3, atol=5e-2, rtol=5e-2), float(
        jnp.max(jnp.abs(y3 - ref3)))

    print("KERNEL_OK")
</pallas_src>

<mosaic_0001>
module attributes {stable_mosaic.version = 11 : i64} {
  func.func @_linear_kernel_oneshot(%arg0: i32, %arg1: i32, %arg2: i32, %arg3: memref<8x32xf32, #tpu.memory_space<vmem>>, %arg4: memref<32x128xbf16, #tpu.memory_space<vmem>>, %arg5: memref<1x128xf32, #tpu.memory_space<vmem>>, %arg6: memref<8x128xf32, #tpu.memory_space<vmem>>) attributes {dimension_semantics = [#tpu.dimension_semantics<parallel>, #tpu.dimension_semantics<parallel>, #tpu.dimension_semantics<arbitrary>], iteration_bounds = array<i64: 1, 2, 1>, scalar_prefetch = 0 : i64, scratch_operands = 0 : i64, tpu.core_type = #tpu.core_type<tc>, window_params = [{transform_indices = @transform_0, window_bounds = array<i64: 8, 32>}, {transform_indices = @transform_1, window_bounds = array<i64: 32, 128>}, {transform_indices = @transform_2, window_bounds = array<i64: 1, 128>}, {transform_indices = @transform_3, window_bounds = array<i64: 8, 128>}]} {
    %c0 = arith.constant 0 : index
    %c0_0 = arith.constant 0 : index
    %0 = vector.load %arg4[%c0, %c0_0] : memref<32x128xbf16, #tpu.memory_space<vmem>>, vector<32x128xbf16>
    %c0_1 = arith.constant 0 : index
    %c0_2 = arith.constant 0 : index
    %1 = vector.load %arg3[%c0_1, %c0_2] : memref<8x32xf32, #tpu.memory_space<vmem>>, vector<8x32xf32>
    %2 = arith.truncf %1 : vector<8x32xf32> to vector<8x32xbf16>
    %cst = arith.constant dense<0.000000e+00> : vector<8x128xf32>
    %3 = tpu.matmul %2, %0, %cst {dimension_numbers = #tpu.dot_dimension_numbers<[1], [0], [0], [1], [0, 0, 1, 1], [], []>} : vector<8x32xbf16>, vector<32x128xbf16>, vector<8x128xf32> -> vector<8x128xf32>
    %c0_3 = arith.constant 0 : index
    %c0_4 = arith.constant 0 : index
    %4 = vector.load %arg5[%c0_3, %c0_4] : memref<1x128xf32, #tpu.memory_space<vmem>>, vector<1x128xf32>
    %5 = vector.broadcast %4 : vector<1x128xf32> to vector<8x128xf32>
    %6 = arith.addf %3, %5 : vector<8x128xf32>
    %c0_5 = arith.constant 0 : index
    %c0_6 = arith.constant 0 : index
    %7 = vector.load %arg6[%c0_5, %c0_6] : memref<8x128xf32, #tpu.memory_space<vmem>>, vector<8x128xf32>
    tpu.vector_store %arg6[%c0_5, %c0_6], %6 {strides = array<i32>} : memref<8x128xf32, #tpu.memory_space<vmem>>, vector<8x128xf32>,
    return
  }
  func.func @transform_0(%arg0: i32, %arg1: i32, %arg2: i32) -> (i32, i32) {
    %c0_i32 = arith.constant 0 : i32
    return %arg1, %arg2 : i32, i32
  }
  func.func @transform_1(%arg0: i32, %arg1: i32, %arg2: i32) -> (i32, i32) {
    %c0_i32 = arith.constant 0 : i32
    return %arg2, %arg0 : i32, i32
  }
  func.func @transform_2(%arg0: i32, %arg1: i32, %arg2: i32) -> (i32, i32) {
    %c0_i32 = arith.constant 0 : i32
    %c0_i32_0 = arith.constant 0 : i32
    return %c0_i32, %arg0 : i32, i32
  }
  func.func @transform_3(%arg0: i32, %arg1: i32, %arg2: i32) -> (i32, i32) {
    %c0_i32 = arith.constant 0 : i32
    return %arg1, %arg0 : i32, i32
  }
}

</mosaic_0001>

<llo_original>
// kernel: tpu_custom_call.1
$region0: #{tpu_custom_call.1}
  #allocation0 [shape = 'u32[]', space=smem, size = 0x4, offset = 0x4, fixed_abs, tag = 'smem constant byte address 0x4 - core index']
  #allocation1 [shape = 'u32[144,128]{1,0:T(1,128)}', space=vmem, size = 0x12000, scoped, tag = 'internal scratch']
  %s0 = inlined_call_operand.hbm [shape: f32[16,32], index: 0, kind: input, shape index: {}]
  %s1 = inlined_call_operand.hbm [shape: bf16[32,128], index: 1, kind: input, shape index: {}]
  %s2 = inlined_call_operand.vmem [shape: f32[1,128], index: 2, kind: input, shape index: {}]
  %s3 = inlined_call_operand.hbm [shape: f32[16,128], index: 3, kind: output, shape index: {}]
  %s4 = sld [smem:[#allocation0]]
  $region53: #{tpu_custom_call.1} parent=0
    _
  %s6 = ssub.s32 1, %s4
  %s7 = scalar_select 0, %s6, %s4
  $region1: #{tpu_custom_call.1} parent=0
    #allocation2 [shape = 'u8[8192]{0}', space=vmem, size = 0x2000, scoped, tag = 'input window, operand 0']
    #allocation3 [shape = 's32[2]{0}', space=sflag, size = 0x8, scoped, tag = 'scoped memory for tpu_custom_call.1']
    #allocation4 [shape = 's32[2]{0}', space=sflag, size = 0x8, scoped, tag = 'scoped memory for tpu_custom_call.1']
    #allocation5 [shape = 'u8[8192]{0}', space=vmem, size = 0x2000, scoped, tag = 'input window, operand 1, single buffered']
    #allocation6 [shape = 's32[1]{0}', space=sflag, size = 0x4, scoped, tag = 'scoped memory for tpu_custom_call.1']
    #allocation7 [shape = 'u8[8192]{0}', space=vmem, size = 0x2000, scoped, tag = 'output window, operand 0']
    %8 = vsyncpa [#allocation3], 0
    %s9 = scalar_lea.sflag [#allocation3], 1
    %10 = vsyncpa %s9, 0
    %11 = vsyncpa [#allocation6], 0
    %12 = vsyncpa [#allocation4], 0
    %s13 = scalar_lea.sflag [#allocation4], 1
    %14 = vsyncpa %s13, 0
    loop: start=0, step=1, limit=4
    $region2: #{tpu_custom_call.1} parent=1 // loop_pre_header
      _
    $region3: #{tpu_custom_call.1} parent=1 // loop_header
      %s16 = sphi 0, %s20
      %p17 = scmp.ge.s32.totalorder %s16, 4
      %s23 = sphi 0, %s42
      %s24 = sphi 0, %s38
      %s25 = sphi 0, %s34
      %s26 = sphi 0, %s23
      %s27 = sphi 0, %s24
      %s28 = sphi 0, %s25
      %s29 = sphi 0, %s26
      %s30 = sphi 0, %s27
      %s31 = sphi 0, %s28
      %s47 = sphi 0, %s49
      %s50 = sphi 0, %s47
      %s51 = sphi 0, %s50
      %s67 = sphi 0, %s51
      %s75 = sphi 0, %s77
      %s78 = sphi 0, %s75
      %s79 = sphi 0, %s78
      %s95 = sphi 0, %s79
      %s101 = sphi 0, %s103
      %s104 = sphi 0, %s101
      %s105 = sphi 0, %s104
      %s121 = sphi 0, %s105
      %s129 = sphi 0, %s131
      %s132 = sphi 0, %s129
      %s133 = sphi 0, %s132
      %s149 = sphi 0, %s133
    $region4: #{tpu_custom_call.1} parent=1 // loop_header_branch
      %19 = sbr.rel (%p17) target = $region8
    $region5: #{tpu_custom_call.1} parent=1 // loop_body
      %s21 = ssub.s32 %s16, 1
      %s22 = ssub.s32 %s16, 2
      %s32 = sadd.s32 1, %s25
      %p33 = scmp.ge.s32.totalorder %s32, 1
      %s34 = scalar_select %p33, 0, %s32
      %s35 = sadd.s32 1, %s24
      %s36 = scalar_select %p33, %s35, %s24
      %p37 = scmp.ge.s32.totalorder %s36, 2
      %s38 = scalar_select %p37, 0, %s36
      %s39 = sadd.s32 1, %s23
      %s40 = scalar_select %p37, %s39, %s23
      %p41 = scmp.ge.s32.totalorder %s40, 1
      %s42 = scalar_select %p41, 0, %s40
      %s43 = ssub.s32 %s24, %s38
      %s44 = ssub.s32 %s25, %s34
      %s45 = sor.u32 %s43, %s44
      %p46 = scmp.eq.s32.totalorder %s45, 0
      %s48 = sadd.s32 %s47, 1
      %s49 = scalar_select %p46, %s47, %s48
      %p52 = pneg %p46
      %p53 = scmp.eq.s32.totalorder %s16, 1
      %p54 = por %p52, %p53
      %p55 = scmp.ne.s32.totalorder %s47, %s50
      %p56 = scmp.eq.s32.totalorder %s16, 0
      %p57 = por %p55, %p56
      %p58 = scmp.ne.s32.totalorder %s47, %s50
      %p59 = scmp.eq.s32.totalorder %s21, 1
      %p60 = por %p58, %p59
      %p61 = scmp.ne.s32.totalorder %s50, %s51
      %p62 = scmp.eq.s32.totalorder %s21, 0
      %p63 = por %p61, %p62
      %p64 = scmp.ne.s32.totalorder %s50, %s51
      %p65 = scmp.eq.s32.totalorder %s22, 1
      %p66 = por %p64, %p65
      %p68 = scmp.ne.s32.totalorder %s51, %s67
      %p69 = scmp.eq.s32.totalorder %s22, 0
      %p70 = por %p68, %p69
      %s71 = ssub.s32 %s25, %s34
      %s72 = ssub.s32 %s23, %s42
      %s73 = sor.u32 %s71, %s72
      %p74 = scmp.eq.s32.totalorder %s73, 0
      %s76 = sadd.s32 %s75, 1
      %s77 = scalar_select %p74, %s75, %s76
      %p80 = pneg %p74
      %p81 = scmp.eq.s32.totalorder %s16, 1
      %p82 = por %p80, %p81
      %p83 = scmp.ne.s32.totalorder %s75, %s78
      %p84 = scmp.eq.s32.totalorder %s16, 0
      %p85 = por %p83, %p84
      %p86 = scmp.ne.s32.totalorder %s75, %s78
      %p87 = scmp.eq.s32.totalorder %s21, 1
      %p88 = por %p86, %p87
      %p89 = scmp.ne.s32.totalorder %s78, %s79
      %p90 = scmp.eq.s32.totalorder %s21, 0
      %p91 = por %p89, %p90
      %p92 = scmp.ne.s32.totalorder %s78, %s79
      %p93 = scmp.eq.s32.totalorder %s22, 1
      %p94 = por %p92, %p93
      %p96 = scmp.ne.s32.totalorder %s79, %s95
      %p97 = scmp.eq.s32.totalorder %s22, 0
      %p98 = por %p96, %p97
      %s99 = ssub.s32 %s23, %s42
      %p100 = scmp.eq.s32.totalorder %s99, 0
      %s102 = sadd.s32 %s101, 1
      %s103 = scalar_select %p100, %s101, %s102
      %p106 = pneg %p100
      %p107 = scmp.eq.s32.totalorder %s16, 1
      %p108 = por %p106, %p107
      %p109 = scmp.ne.s32.totalorder %s101, %s104
      %p110 = scmp.eq.s32.totalorder %s16, 0
      %p111 = por %p109, %p110
      %p112 = scmp.ne.s32.totalorder %s101, %s104
      %p113 = scmp.eq.s32.totalorder %s21, 1
      %p114 = por %p112, %p113
      %p115 = scmp.ne.s32.totalorder %s104, %s105
      %p116 = scmp.eq.s32.totalorder %s21, 0
      %p117 = por %p115, %p116
      %p118 = scmp.ne.s32.totalorder %s104, %s105
      %p119 = scmp.eq.s32.totalorder %s22, 1
      %p120 = por %p118, %p119
      %p122 = scmp.ne.s32.totalorder %s105, %s121
      %p123 = scmp.eq.s32.totalorder %s22, 0
      %p124 = por %p122, %p123
      %s125 = ssub.s32 %s24, %s38
      %s126 = ssub.s32 %s23, %s42
      %s127 = sor.u32 %s125, %s126
      %p128 = scmp.eq.s32.totalorder %s127, 0
      %s130 = sadd.s32 %s129, 1
      %s131 = scalar_select %p128, %s129, %s130
      %p134 = pneg %p128
      %p135 = scmp.eq.s32.totalorder %s16, 1
      %p136 = por %p134, %p135
      %p137 = scmp.ne.s32.totalorder %s129, %s132
      %p138 = scmp.eq.s32.totalorder %s16, 0
      %p139 = por %p137, %p138
      %p140 = scmp.ne.s32.totalorder %s129, %s132
      %p141 = scmp.eq.s32.totalorder %s21, 1
      %p142 = por %p140, %p141
      %p143 = scmp.ne.s32.totalorder %s132, %s133
      %p144 = scmp.eq.s32.totalorder %s21, 0
      %p145 = por %p143, %p144
      %p146 = scmp.ne.s32.totalorder %s132, %s133
      %p147 = scmp.eq.s32.totalorder %s22, 1
      %p148 = por %p146, %p147
      %p150 = scmp.ne.s32.totalorder %s133, %s149
      %p151 = scmp.eq.s32.totalorder %s22, 0
      %p152 = por %p150, %p151
      %p153 = scmp.le.s32.totalorder 1, %s16
      %p154 = scmp.lt.s32.totalorder %s16, 3
      %p155 = pnand %p153, %p154
      %p156 = pneg %p155
      // Predicated region
      $region9: #{tpu_custom_call.1} parent=5 // pred_check
        _
      $region10: #{tpu_custom_call.1} parent=5 // pred_check_branch
        %158 = sbr.rel (%p155) target = $region12
      $region11: #{tpu_custom_call.1} parent=5 // pred_region
        %s159 = ssub.s32 %s16, 1
        // Predicated region
        $region13: #{tpu_custom_call.1} parent=11 // pred_check
          %p160 = pneg %p91
        $region14: #{tpu_custom_call.1} parent=11 // pred_check_branch
          %162 = sbr.rel (%p160) target = $region16
        $region15: #{tpu_custom_call.1} parent=11 // pred_region
          %s163 = smul.u32 4, %s28
          %s165 = ssub.s32 256, 256
          %166 = vsyncadd [#allocation6], %s165
          %s167 = sadd.s32 %s26, %s163
          %s168 = smul.addr %s167, 64
          %s169 = scalar_lea.hbm %s1, %s168
          %s170 = sshll.u32 [#allocation5], 4
          %s171 = int_to_ptr.vmem [resolvable:$true] %s170
          %176 = dma.hbm_to_vmem [thread:$0]  %s169, 256, %s171, [#allocation6], 64, 64, 4
        $region16: #{tpu_custom_call.1} parent=11 // pred_fallthru
          _
        // Predicated region
        $region17: #{tpu_custom_call.1} parent=11 // pred_check
          %p177 = pneg %p117
        $region18: #{tpu_custom_call.1} parent=11 // pred_check_branch
          %179 = sbr.rel (%p177) target = $region20
        $region19: #{tpu_custom_call.1} parent=11 // pred_region
          %p180 = scmp.lt.s32.totalorder %s26, 0
          %s181 = scalar_select %p180, %s26, 0
          %s182 = scalar_lea.vmem %s2, %s181
        $region20: #{tpu_custom_call.1} parent=11 // pred_fallthru
          _
      $region12: #{tpu_custom_call.1} parent=5 // pred_fallthru
        _
      %p183 = scmp.lt.s32.totalorder %s16, 2
      // Predicated region
      $region21: #{tpu_custom_call.1} parent=5 // pred_check
        %p184 = pneg %p183
      $region22: #{tpu_custom_call.1} parent=5 // pred_check_branch
        %186 = sbr.rel (%p184) target = $region24
      $region23: #{tpu_custom_call.1} parent=5 // pred_region
        // Predicated region
        $region25: #{tpu_custom_call.1} parent=23 // pred_check
          %p187 = pneg %p57
        $region26: #{tpu_custom_call.1} parent=23 // pred_check_branch
          %189 = sbr.rel (%p187) target = $region28
        $region27: #{tpu_custom_call.1} parent=23 // pred_region
          %s190 = sand.u32 %s47, 1
          %s191 = scalar_lea.sflag [#allocation3], %s190
          %s192 = sand.u32 %s47, 1
          %s193 = smul.addr %s192, 8
          %s194 = scalar_lea.vmem [#allocation2], %s193
          %s196 = ssub.s32 128, 128
          %197 = vsyncadd %s191, %s196
          %s198 = sadd.s32 %s25, %s24
          %s199 = smul.addr %s198, 128
          %s200 = scalar_lea.hbm %s0, %s199
          %s202 = sshll.u32 %s194, 4
          %s203 = int_to_ptr.vmem [resolvable:$true] %s202
          %205 = dma.hbm_to_vmem [thread:$0]  %s200, 128, %s203, %s191
        $region28: #{tpu_custom_call.1} parent=23 // pred_fallthru
          _
      $region24: #{tpu_custom_call.1} parent=5 // pred_fallthru
        _
      %p206 = scmp.le.s32.totalorder 1, %s16
      %p207 = scmp.lt.s32.totalorder %s16, 3
      %p208 = pnand %p206, %p207
      %p209 = pneg %p208
      // Predicated region
      $region29: #{tpu_custom_call.1} parent=5 // pred_check
        _
      $region30: #{tpu_custom_call.1} parent=5 // pred_check_branch
        %211 = sbr.rel (%p208) target = $region32
      $region31: #{tpu_custom_call.1} parent=5 // pred_region
        %s212 = ssub.s32 %s16, 1
        %s213 = sand.u32 %s50, 1
        %s214 = scalar_lea.sflag [#allocation3], %s213
        %s215 = sand.u32 %s50, 1
        %s216 = smul.addr %s215, 8
        %s217 = scalar_lea.vmem [#allocation2], %s216
        // Predicated region
        $region33: #{tpu_custom_call.1} parent=31 // pred_check
          %p218 = pneg %p63
        $region34: #{tpu_custom_call.1} parent=31 // pred_check_branch
          %220 = sbr.rel (%p218) target = $region36
        $region35: #{tpu_custom_call.1} parent=31 // pred_region
          %221 = dma.done %s214, 128
        $region36: #{tpu_custom_call.1} parent=31 // pred_fallthru
          _
        // Predicated region
        $region37: #{tpu_custom_call.1} parent=31 // pred_check
          %p222 = pneg %p91
        $region38: #{tpu_custom_call.1} parent=31 // pred_check_branch
          %224 = sbr.rel (%p222) target = $region40
        $region39: #{tpu_custom_call.1} parent=31 // pred_region
          %225 = dma.done [#allocation6], 256
        $region40: #{tpu_custom_call.1} parent=31 // pred_fallthru
          _
        %s226 = sand.u32 %s50, 1
        %s227 = scalar_lea.sflag [#allocation3], %s226
        %s228 = sand.u32 %s50, 1
        %s229 = smul.addr %s228, 8
        %s230 = scalar_lea.vmem [#allocation2], %s229
        %p231 = pneg %p63
        %p232 = pneg %p60
        %p233 = pneg %p91
        %p234 = pneg %p88
        %p235 = scmp.lt.s32.totalorder %s26, 0
        %s236 = scalar_select %p235, %s26, 0
        %s237 = scalar_lea.vmem %s2, %s236
        %p238 = pneg %p117
        %p239 = pneg %p114
        %p240 = pneg %p145
        %p241 = pneg %p142
        %s242 = sand.u32 %s132, 1
        %s243 = scalar_lea.sflag [#allocation4], %s242
        %s244 = sand.u32 %s132, 1
        %s245 = smul.addr %s244, 8
        %s246 = scalar_lea.vmem [#allocation7], %s245
        %s247 = smul.u32 4, %s28
        %p248 = scmp.lt.s32.totalorder %s26, 0
        %s249 = scalar_select %p248, %s26, 0
        %s250 = scalar_lea.vmem %s2, %s249
        %v252 = vld [vmem:[#allocation5] sm:$0xf]
        %v253 = vld [vmem:[#allocation5 + $0x4] sm:$0xf]
        %v254 = vld [vmem:[#allocation5 + $0x8] sm:$0xf]
        %v255 = vld [vmem:[#allocation5 + $0xc] sm:$0xf]
        %v256 = vld [vmem:[%s217] sm:$0xff]
        %v257 = vpack.c.bf16 %v256, %v256
        %v258 = vld [vmem:[%s250] sm:$0x1]
        %v260 = vlaneseq
        %v261 = vshrl.u32 %v260, 7
        %v262 = vsub.s32 0, %v261
        %v263 = vrot.slane %v258, %v262
        %v269 = vunpack.c.l.b16 %v252
        %v270 = vunpack.c.l.b16 %v253
        %v271 = vunpack.c.l.b16 %v254
        %v272 = vunpack.c.l.b16 %v255
        %v273 = vpack.c.b16 %v270, %v269
        %v274 = vpack.c.b16 %v272, %v271
        %vm277 = vcmask 261120
        %v279 = vsel %vm277, %v257, 0
        %281 = vmatprep.subr.bf16.mxu0 0
        %282 = vmatpush1.bf16.msra.mxu0 %v273
        %283 = vmatprep.subr.bf16.mxu0 0
        %284 = vmatpush1.bf16.msra.mxu0 %v274
        %285 = vmatprep.subr.bf16.mxu0 0
        %286 = vmatpush1.bf16.msra.mxu0 0
        %287 = vmatprep.subr.bf16.mxu0 0
        %288 = vmatpush1.bf16.msra.mxu0 0
        %289 = vmatprep.subr.bf16.mxu0 0
        %290 = vmatpush1.bf16.msra.mxu0 0
        %291 = vmatprep.subr.bf16.mxu0 0
        %292 = vmatpush1.bf16.msra.mxu0 0
        %293 = vmatprep.subr.bf16.mxu0 0
        %294 = vmatpush1.bf16.msra.mxu0 0
        %295 = vmatprep.subr.bf16.mxu0 0
        %296 = vmatpush1.bf16.msra.mxu0 0
        %297 = vmatprep.subr.bf16.mxu0 0
        %298 = vmatpush1.bf16.msra.mxu0 0
        %299 = vmatprep.subr.bf16.mxu0 0
        %300 = vmatpush1.bf16.msra.mxu0 0
        %301 = vmatprep.subr.bf16.mxu0 0
        %302 = vmatpush1.bf16.msra.mxu0 0
        %303 = vmatprep.subr.bf16.mxu0 0
        %304 = vmatpush1.bf16.msra.mxu0 0
        %305 = vmatprep.subr.bf16.mxu0 0
        %306 = vmatpush1.bf16.msra.mxu0 0
        %307 = vmatprep.subr.bf16.mxu0 0
        %308 = vmatpush1.bf16.msra.mxu0 0
        %309 = vmatprep.subr.bf16.mxu0 0
        %310 = vmatpush1.bf16.msra.mxu0 0
        %311 = vmatprep.subr.bf16.mxu0 0
        %312 = vmatpush1.bf16.msra.mxu0 0
        %313 = vmatprep.mubr.bf16.mxu0 0
        %314 = vmatmul.mubr.bf16.gmra.mrb[0].mxu0 %v279
        %v315 = vpop.f32.mrb[0].mxu0
        %v316 = vadd.f32 %v263, %v315
        %v317 = vpop.f32.mrb[0].mxu0
        %v318 = vpop.f32.mrb[0].mxu0
        %v319 = vpop.f32.mrb[0].mxu0
        %320 = vdwg.mxu0
        %321 = vst [vmem:[%s246] sm:$0xff] %v316
        %s322 = sand.u32 %s132, 1
        %s323 = scalar_lea.sflag [#allocation4], %s322
        %s324 = sand.u32 %s132, 1
        %s325 = smul.addr %s324, 8
        %s326 = scalar_lea.vmem [#allocation7], %s325
        // Predicated region
        $region41: #{tpu_custom_call.1} parent=31 // pred_check
          %p327 = pneg %p142
        $region42: #{tpu_custom_call.1} parent=31 // pred_check_branch
          %329 = sbr.rel (%p327) target = $region44
        $region43: #{tpu_custom_call.1} parent=31 // pred_region
          %s331 = ssub.s32 128, 128
          %332 = vsyncadd %s323, %s331
          %s333 = sadd.s32 %s26, %s27
          %s334 = smul.addr %s333, 128
          %s335 = scalar_lea.hbm %s3, %s334
          %s337 = sshll.u32 %s326, 4
          %s338 = int_to_ptr.vmem [resolvable:$true] %s337
          %340 = dma.vmem_to_hbm [thread:$0]  %s338, 128, %s335, %s323
        $region44: #{tpu_custom_call.1} parent=31 // pred_fallthru
          _
      $region32: #{tpu_custom_call.1} parent=5 // pred_fallthru
        _
      %p341 = scmp.le.s32.totalorder 2, %s16
      // Predicated region
      $region45: #{tpu_custom_call.1} parent=5 // pred_check
        %p342 = pneg %p341
      $region46: #{tpu_custom_call.1} parent=5 // pred_check_branch
        %344 = sbr.rel (%p342) target = $region48
      $region47: #{tpu_custom_call.1} parent=5 // pred_region
        %s345 = ssub.s32 %s16, 2
        // Predicated region
        $region49: #{tpu_custom_call.1} parent=47 // pred_check
          %p346 = pneg %p148
        $region50: #{tpu_custom_call.1} parent=47 // pred_check_branch
          %348 = sbr.rel (%p346) target = $region52
        $region51: #{tpu_custom_call.1} parent=47 // pred_region
          %s349 = sand.u32 %s133, 1
          %s350 = scalar_lea.sflag [#allocation4], %s349
          %s351 = sand.u32 %s133, 1
          %s352 = smul.addr %s351, 8
          %s353 = scalar_lea.vmem [#allocation7], %s352
          %354 = dma.done %s350, 128
        $region52: #{tpu_custom_call.1} parent=47 // pred_fallthru
          _
      $region48: #{tpu_custom_call.1} parent=5 // pred_fallthru
        _
    $region6: #{tpu_custom_call.1} parent=1 // loop_footer
      %s20 = sadd.s32 1, %s16
    $region7: #{tpu_custom_call.1} parent=1 // loop_footer_branch
      %15 = sbr.rel target = $region3
    $region8: #{tpu_custom_call.1} parent=1 // loop_exit
      _
    %355 = vsyncpa [#allocation3], 1
    %s356 = scalar_lea.sflag [#allocation3], 1
    %357 = vsyncpa %s356, 1
    %358 = vsyncpa [#allocation6], 1
    %359 = vsyncpa [#allocation4], 1
    %s360 = scalar_lea.sflag [#allocation4], 1
    %361 = vsyncpa %s360, 1

</llo_original>
